<compile_context>
chip_gen: v6e
topology: v6e:2x2x1
jax: 0.10.0
libtpu: 0.0.40
codegen_flags: <defaults>
</compile_context>

<pallas_src>
import functools
import math

import jax
import jax.numpy as jnp
from jax.experimental import pallas as pl
from jax.experimental.pallas import tpu as pltpu


def _round_up(x, m):
    return ((x + m - 1) // m) * m


def _tpu_config():
    """Returns (lane alignment for feature padding, vmem_limit_bytes or None)."""
    kind = ""
    try:
        kind = jax.devices()[0].device_kind.lower()
    except Exception:
        pass
    if "v7" in kind or "tpu7" in kind or "7x" in kind:
        return 256, 56 * 1024 * 1024     # 64 MiB physical per TC; leave headroom
    if "v6" in kind:
        return 256, 100 * 1024 * 1024    # 2x256x256 MXU, 128 MiB VMEM
    if "v5e" in kind or "v5 lite" in kind or "v5lite" in kind:
        return 128, 100 * 1024 * 1024    # 128x128 MXU, 128 MiB VMEM
    return 128, None                     # unknown chip: safe defaults


def _pick_batch_tile(B):
    # Bigger tiles amortize per-grid-step cost; keep >=2 tiles for big B so
    # both v7x TensorCores get work.
    if B >= 1024:
        return 512
    if B >= 512:
        return 256
    if B >= 256:
        return 128
    return _round_up(max(B, 1), 8)       # single sublane-aligned tile


# ----------------------------- Pallas kernel --------------------------------

def _fused_chain_kernel(x_ref, *refs, relu_flags):
    """Runs the whole layer chain on one (tb, d0_pad) activation tile.

    x_ref : (tb, d0_pad) bf16 activation tile (zero-padded lanes)
    refs  : w_0, b_0, w_1, b_1, ..., w_{L-1}, b_{L-1}, o_ref
            w_l : (din_pad_l, dout_pad_l) bf16 folded weight ((W*mask)*BN-scale)
            b_l : (1, dout_pad_l)        f32  folded bias    (b*scale + shift)
    o_ref : (tb, dout_pad_{L-1}) f32
    """
    L = len(relu_flags)
    o_ref = refs[2 * L]
    h = x_ref[...]                                     # bf16
    for l, relu in enumerate(relu_flags):              # static unroll over layers
        w = refs[2 * l][...]
        b = refs[2 * l + 1][...]
        z = jnp.dot(h, w, preferred_element_type=jnp.float32) + b   # f32 accum
        if relu:
            z = jnp.maximum(z, 0.0)
        # feed next MXU matmul in bf16; keep the final result in f32
        h = z.astype(jnp.bfloat16) if l != L - 1 else z
    o_ref[...] = h.astype(o_ref.dtype)


def _fused_chain_call(x_pad, w_pads, b_pads, relu_flags, tb, vmem_limit_bytes):
    Bp, d0p = x_pad.shape
    L = len(w_pads)
    d_out_pad = w_pads[-1].shape[1]

    kernel = functools.partial(_fused_chain_kernel, relu_flags=tuple(relu_flags))

    in_specs = [pl.BlockSpec((tb, d0p), lambda i: (i, 0))]     # batch-tiled acts
    flat_inputs = [x_pad]
    for l in range(L):
        # constant index_map -> weights/biases fetched once per core, resident
        in_specs.append(pl.BlockSpec(w_pads[l].shape, lambda i: (0, 0)))
        in_specs.append(pl.BlockSpec(b_pads[l].shape, lambda i: (0, 0)))
        flat_inputs += [w_pads[l], b_pads[l]]

    cp_kwargs = dict(dimension_semantics=("parallel",))        # both TCs on v7x
    if vmem_limit_bytes is not None:
        cp_kwargs["vmem_limit_bytes"] = int(vmem_limit_bytes)

    return pl.pallas_call(
        kernel,
        out_shape=jax.ShapeDtypeStruct((Bp, d_out_pad), jnp.float32),
        grid=(Bp // tb,),
        in_specs=in_specs,
        out_specs=pl.BlockSpec((tb, d_out_pad), lambda i: (i, 0)),
        compiler_params=pltpu.CompilerParams(**cp_kwargs),
    )(*flat_inputs)


# --------------------------- parameter building -----------------------------

def _kaiming_uniform(key, out_dim, in_dim):
    # PyTorch kaiming_uniform_(a=sqrt(5)) on (out, in) -> bound = 1/sqrt(fan_in)
    bound = 1.0 / math.sqrt(in_dim)
    return jax.random.uniform(key, (out_dim, in_dim), jnp.float32, -bound, bound)


def _bias_init(key, out_dim, fan_in):
    bound = 1.0 / math.sqrt(fan_in) if fan_in > 0 else 0.0
    return jax.random.uniform(key, (out_dim,), jnp.float32, -bound, bound)


def _bn_fold(dim, eps=1e-5):
    # PyTorch BatchNorm1d init: gamma=1, beta=0, running_mean=0, running_var=1
    gamma = jnp.ones((dim,), jnp.float32)
    beta = jnp.zeros((dim,), jnp.float32)
    rmean = jnp.zeros((dim,), jnp.float32)
    rvar = jnp.ones((dim,), jnp.float32)
    scale = gamma / jnp.sqrt(rvar + eps)
    shift = beta - rmean * scale
    return scale, shift


def build_sparse_dae_params(key, maps, eps=1e-5):
    """maps[i]: float (din_i, dout_i) adjacency matrix (1/0 entries)."""
    align, vmem_limit = _tpu_config()

    folded = []      # (w_fold (din,dout) f32, b_fold (dout,) f32, relu)
    ref_layers = []  # unfolded params for the pure-JAX f32 reference

    # ---- encoder: SparseLinear + BN + ReLU per map ----
    for adj in maps:
        adj = jnp.asarray(adj, jnp.float32)
        din, dout = adj.shape
        key, kw, kb = jax.random.split(key, 3)
        w = _kaiming_uniform(kw, dout, din)            # (out, in) as in PyTorch
        b = _bias_init(kb, dout, din)
        scale, shift = _bn_fold(dout, eps)
        w_t = w.T                                      # (din, dout)
        ref_layers.append(dict(w_t=w_t, mask=adj, bias=b,
                               scale=scale, shift=shift, relu=True))
        folded.append(((w_t * adj) * scale[None, :], b * scale + shift, True))

    # ---- decoder: Linear (+ BN + ReLU except last) per reversed map ----
    rev = maps[::-1]
    for n, adj in enumerate(rev):
        adj = jnp.asarray(adj, jnp.float32)
        din, dout = adj.shape[1], adj.shape[0]         # Linear(map.size(1), map.size(0))
        key, kw, kb = jax.random.split(key, 3)
        w = _kaiming_uniform(kw, dout, din)
        b = _bias_init(kb, dout, din)
        last = n == len(rev) - 1
        if last:
            scale = jnp.ones((dout,), jnp.float32)
            shift = jnp.zeros((dout,), jnp.float32)
        else:
            scale, shift = _bn_fold(dout, eps)
        w_t = w.T
        ref_layers.append(dict(w_t=w_t, mask=jnp.ones((din, dout), jnp.float32),
                               bias=b, scale=scale, shift=shift, relu=not last))
        folded.append((w_t * scale[None, :], b * scale + shift, not last))

    # ---- per-layer padding to the generation's lane alignment ----
    # Invariant: padded weight rows/cols, padded bias lanes and padded input
    # lanes are exactly zero, so padded activations stay zero through ReLU.
    w_pads, b_pads, relu_flags = [], [], []
    for w_fold, b_fold, relu in folded:
        di, do = w_fold.shape
        dip, dop = _round_up(di, align), _round_up(do, align)
        wp = jnp.zeros((dip, dop), jnp.bfloat16).at[:di, :do].set(
            w_fold.astype(jnp.bfloat16))               # bf16 weights for MXU rate
        bp = jnp.zeros((1, dop), jnp.float32).at[0, :do].set(b_fold)  # f32 bias (tiny)
        w_pads.append(wp)
        b_pads.append(bp)
        relu_flags.append(bool(relu))

    return dict(w_pads=tuple(w_pads), b_pads=tuple(b_pads),
                relu=tuple(relu_flags), align=align, vmem_limit=vmem_limit,
                in_dim=int(maps[0].shape[0]), out_dim=int(maps[0].shape[0]),
                ref_layers=ref_layers)


# --------------------------------- forward -----------------------------------

def sparse_dae_forward(params, x):
    B, din = x.shape
    d0p = params["w_pads"][0].shape[0]
    tb = _pick_batch_tile(B)
    Bp = _round_up(B, tb)
    x_pad = jnp.zeros((Bp, d0p), jnp.bfloat16).at[:B, :din].set(
        x.astype(jnp.bfloat16))
    out_pad = _fused_chain_call(x_pad, params["w_pads"], params["b_pads"],
                                params["relu"], tb, params["vmem_limit"])
    return out_pad[:B, :params["out_dim"]]


# Pure-JAX f32 reference (unfolded mask / bias / BN) for correctness checking.
def sparse_dae_reference(params, x):
    hp = jax.lax.Precision.HIGHEST
    h = x.astype(jnp.float32)
    for layer in params["ref_layers"]:
        z = jnp.dot(h, layer["w_t"] * layer["mask"], precision=hp) + layer["bias"]
        z = z * layer["scale"] + layer["shift"]
        h = jnp.maximum(z, 0.0) if layer["relu"] else z
    return h


# --------------------------------- main --------------------------------------

if __name__ == "__main__":
    key = jax.random.PRNGKey(0)

    B = 8
    dims = [64, 32, 16]  # maps: (64->32), (32->16); decoder mirrors back to 64

    # deterministic binary adjacency matrices (din, dout)
    maps = []
    for i in range(len(dims) - 1):
        key, km = jax.random.split(key)
        adj = jax.random.bernoulli(km, 0.5, (dims[i], dims[i + 1])).astype(jnp.float32)
        maps.append(adj)

    key, kp, kx = jax.random.split(key, 3)
    params = build_sparse_dae_params(kp, maps)
    x = jax.random.normal(kx, (B, dims[0]), jnp.float32)

    # single jitted dispatch; folded bf16 weights/biases are baked in as constants
    fwd = jax.jit(functools.partial(sparse_dae_forward, params))
    out = jax.block_until_ready(fwd(x))

    ref = sparse_dae_reference(params, x)
    assert out.shape == (B, dims[0]), out.shape
    # bf16 weights/activations with f32 accumulation -> loosened tolerance vs.
    # the f32 HIGHEST-precision reference.
    denom = jnp.maximum(jnp.max(jnp.abs(ref)), 1.0)
    rel_err = float(jnp.max(jnp.abs(out - ref)) / denom)
    assert rel_err < 5e-2, f"mismatch vs reference: rel_err={rel_err}"

    print("KERNEL_OK")
</pallas_src>

<mosaic_0001>
module attributes {stable_mosaic.version = 11 : i64} {
  func.func @_fused_chain_kernel(%arg0: i32, %arg1: memref<8x128xbf16, #tpu.memory_space<vmem>>, %arg2: memref<128x128xbf16, #tpu.memory_space<vmem>>, %arg3: memref<1x128xf32, #tpu.memory_space<vmem>>, %arg4: memref<128x128xbf16, #tpu.memory_space<vmem>>, %arg5: memref<1x128xf32, #tpu.memory_space<vmem>>, %arg6: memref<128x128xbf16, #tpu.memory_space<vmem>>, %arg7: memref<1x128xf32, #tpu.memory_space<vmem>>, %arg8: memref<128x128xbf16, #tpu.memory_space<vmem>>, %arg9: memref<1x128xf32, #tpu.memory_space<vmem>>, %arg10: memref<8x128xf32, #tpu.memory_space<vmem>>) attributes {dimension_semantics = [#tpu.dimension_semantics<parallel>], iteration_bounds = array<i64: 1>, scalar_prefetch = 0 : i64, scratch_operands = 0 : i64, tpu.core_type = #tpu.core_type<tc>, window_params = [{transform_indices = @transform_0, window_bounds = array<i64: 8, 128>}, {pipeline_mode = #tpu.pipeline_mode<synchronous>, transform_indices = @transform_1, window_bounds = array<i64: 128, 128>}, {pipeline_mode = #tpu.pipeline_mode<synchronous>, transform_indices = @transform_2, window_bounds = array<i64: 1, 128>}, {pipeline_mode = #tpu.pipeline_mode<synchronous>, transform_indices = @transform_3, window_bounds = array<i64: 128, 128>}, {pipeline_mode = #tpu.pipeline_mode<synchronous>, transform_indices = @transform_4, window_bounds = array<i64: 1, 128>}, {pipeline_mode = #tpu.pipeline_mode<synchronous>, transform_indices = @transform_5, window_bounds = array<i64: 128, 128>}, {pipeline_mode = #tpu.pipeline_mode<synchronous>, transform_indices = @transform_6, window_bounds = array<i64: 1, 128>}, {pipeline_mode = #tpu.pipeline_mode<synchronous>, transform_indices = @transform_7, window_bounds = array<i64: 128, 128>}, {pipeline_mode = #tpu.pipeline_mode<synchronous>, transform_indices = @transform_8, window_bounds = array<i64: 1, 128>}, {transform_indices = @transform_9, window_bounds = array<i64: 8, 128>}]} {
    %c0 = arith.constant 0 : index
    %c0_0 = arith.constant 0 : index
    %0 = vector.load %arg1[%c0, %c0_0] : memref<8x128xbf16, #tpu.memory_space<vmem>>, vector<8x128xbf16>
    %c0_1 = arith.constant 0 : index
    %c0_2 = arith.constant 0 : index
    %1 = vector.load %arg2[%c0_1, %c0_2] : memref<128x128xbf16, #tpu.memory_space<vmem>>, vector<128x128xbf16>
    %c0_3 = arith.constant 0 : index
    %c0_4 = arith.constant 0 : index
    %2 = vector.load %arg3[%c0_3, %c0_4] : memref<1x128xf32, #tpu.memory_space<vmem>>, vector<1x128xf32>
    %cst = arith.constant dense<0.000000e+00> : vector<8x128xf32>
    %3 = tpu.matmul %0, %1, %cst {dimension_numbers = #tpu.dot_dimension_numbers<[1], [0], [0], [1], [0, 0, 1, 1], [], []>} : vector<8x128xbf16>, vector<128x128xbf16>, vector<8x128xf32> -> vector<8x128xf32>
    %4 = vector.broadcast %2 : vector<1x128xf32> to vector<8x128xf32>
    %5 = arith.addf %3, %4 : vector<8x128xf32>
    %cst_5 = arith.constant 0.000000e+00 : f32
    %6 = vector.broadcast %cst_5 : f32 to vector<8x128xf32>
    %7 = arith.maximumf %5, %6 : vector<8x128xf32>
    %8 = arith.truncf %7 : vector<8x128xf32> to vector<8x128xbf16>
    %c0_6 = arith.constant 0 : index
    %c0_7 = arith.constant 0 : index
    %9 = vector.load %arg4[%c0_6, %c0_7] : memref<128x128xbf16, #tpu.memory_space<vmem>>, vector<128x128xbf16>
    %c0_8 = arith.constant 0 : index
    %c0_9 = arith.constant 0 : index
    %10 = vector.load %arg5[%c0_8, %c0_9] : memref<1x128xf32, #tpu.memory_space<vmem>>, vector<1x128xf32>
    %cst_10 = arith.constant dense<0.000000e+00> : vector<8x128xf32>
    %11 = tpu.matmul %8, %9, %cst_10 {dimension_numbers = #tpu.dot_dimension_numbers<[1], [0], [0], [1], [0, 0, 1, 1], [], []>} : vector<8x128xbf16>, vector<128x128xbf16>, vector<8x128xf32> -> vector<8x128xf32>
    %12 = vector.broadcast %10 : vector<1x128xf32> to vector<8x128xf32>
    %13 = arith.addf %11, %12 : vector<8x128xf32>
    %cst_11 = arith.constant 0.000000e+00 : f32
    %14 = vector.broadcast %cst_11 : f32 to vector<8x128xf32>
    %15 = arith.maximumf %13, %14 : vector<8x128xf32>
    %16 = arith.truncf %15 : vector<8x128xf32> to vector<8x128xbf16>
    %c0_12 = arith.constant 0 : index
    %c0_13 = arith.constant 0 : index
    %17 = vector.load %arg6[%c0_12, %c0_13] : memref<128x128xbf16, #tpu.memory_space<vmem>>, vector<128x128xbf16>
    %c0_14 = arith.constant 0 : index
    %c0_15 = arith.constant 0 : index
    %18 = vector.load %arg7[%c0_14, %c0_15] : memref<1x128xf32, #tpu.memory_space<vmem>>, vector<1x128xf32>
    %cst_16 = arith.constant dense<0.000000e+00> : vector<8x128xf32>
    %19 = tpu.matmul %16, %17, %cst_16 {dimension_numbers = #tpu.dot_dimension_numbers<[1], [0], [0], [1], [0, 0, 1, 1], [], []>} : vector<8x128xbf16>, vector<128x128xbf16>, vector<8x128xf32> -> vector<8x128xf32>
    %20 = vector.broadcast %18 : vector<1x128xf32> to vector<8x128xf32>
    %21 = arith.addf %19, %20 : vector<8x128xf32>
    %cst_17 = arith.constant 0.000000e+00 : f32
    %22 = vector.broadcast %cst_17 : f32 to vector<8x128xf32>
    %23 = arith.maximumf %21, %22 : vector<8x128xf32>
    %24 = arith.truncf %23 : vector<8x128xf32> to vector<8x128xbf16>
    %c0_18 = arith.constant 0 : index
    %c0_19 = arith.constant 0 : index
    %25 = vector.load %arg8[%c0_18, %c0_19] : memref<128x128xbf16, #tpu.memory_space<vmem>>, vector<128x128xbf16>
    %c0_20 = arith.constant 0 : index
    %c0_21 = arith.constant 0 : index
    %26 = vector.load %arg9[%c0_20, %c0_21] : memref<1x128xf32, #tpu.memory_space<vmem>>, vector<1x128xf32>
    %cst_22 = arith.constant dense<0.000000e+00> : vector<8x128xf32>
    %27 = tpu.matmul %24, %25, %cst_22 {dimension_numbers = #tpu.dot_dimension_numbers<[1], [0], [0], [1], [0, 0, 1, 1], [], []>} : vector<8x128xbf16>, vector<128x128xbf16>, vector<8x128xf32> -> vector<8x128xf32>
    %28 = vector.broadcast %26 : vector<1x128xf32> to vector<8x128xf32>
    %29 = arith.addf %27, %28 : vector<8x128xf32>
    %c0_23 = arith.constant 0 : index
    %c0_24 = arith.constant 0 : index
    %30 = vector.load %arg10[%c0_23, %c0_24] : memref<8x128xf32, #tpu.memory_space<vmem>>, vector<8x128xf32>
    tpu.vector_store %arg10[%c0_23, %c0_24], %29 {strides = array<i32>} : memref<8x128xf32, #tpu.memory_space<vmem>>, vector<8x128xf32>,
    return
  }
  func.func @transform_0(%arg0: i32) -> (i32, i32) {
    %c0_i32 = arith.constant 0 : i32
    %c0_i32_0 = arith.constant 0 : i32
    return %arg0, %c0_i32 : i32, i32
  }
  func.func @transform_1(%arg0: i32) -> (i32, i32) {
    %c0_i32 = arith.constant 0 : i32
    %c0_i32_0 = arith.constant 0 : i32
    %c0_i32_1 = arith.constant 0 : i32
    return %c0_i32, %c0_i32_0 : i32, i32
  }
  func.func @transform_2(%arg0: i32) -> (i32, i32) {
    %c0_i32 = arith.constant 0 : i32
    %c0_i32_0 = arith.constant 0 : i32
    %c0_i32_1 = arith.constant 0 : i32
    return %c0_i32, %c0_i32_0 : i32, i32
  }
  func.func @transform_3(%arg0: i32) -> (i32, i32) {
    %c0_i32 = arith.constant 0 : i32
    %c0_i32_0 = arith.constant 0 : i32
    %c0_i32_1 = arith.constant 0 : i32
    return %c0_i32, %c0_i32_0 : i32, i32
  }
  func.func @transform_4(%arg0: i32) -> (i32, i32) {
    %c0_i32 = arith.constant 0 : i32
    %c0_i32_0 = arith.constant 0 : i32
    %c0_i32_1 = arith.constant 0 : i32
    return %c0_i32, %c0_i32_0 : i32, i32
  }
  func.func @transform_5(%arg0: i32) -> (i32, i32) {
    %c0_i32 = arith.constant 0 : i32
    %c0_i32_0 = arith.constant 0 : i32
    %c0_i32_1 = arith.constant 0 : i32
    return %c0_i32, %c0_i32_0 : i32, i32
  }
  func.func @transform_6(%arg0: i32) -> (i32, i32) {
    %c0_i32 = arith.constant 0 : i32
    %c0_i32_0 = arith.constant 0 : i32
    %c0_i32_1 = arith.constant 0 : i32
    return %c0_i32, %c0_i32_0 : i32, i32
  }
  func.func @transform_7(%arg0: i32) -> (i32, i32) {
    %c0_i32 = arith.constant 0 : i32
    %c0_i32_0 = arith.constant 0 : i32
    %c0_i32_1 = arith.constant 0 : i32
    return %c0_i32, %c0_i32_0 : i32, i32
  }
  func.func @transform_8(%arg0: i32) -> (i32, i32) {
    %c0_i32 = arith.constant 0 : i32
    %c0_i32_0 = arith.constant 0 : i32
    %c0_i32_1 = arith.constant 0 : i32
    return %c0_i32, %c0_i32_0 : i32, i32
  }
  func.func @transform_9(%arg0: i32) -> (i32, i32) {
    %c0_i32 = arith.constant 0 : i32
    %c0_i32_0 = arith.constant 0 : i32
    return %arg0, %c0_i32 : i32, i32
  }
}

</mosaic_0001>

<llo_original>
// kernel: sparse_dae_forward.1
$region0: #{sparse_dae_forward.1}
  #allocation0 [shape = 'u32[]', space=smem, size = 0x4, offset = 0x4, fixed_abs, tag = 'smem constant byte address 0x4 - core index']
  #allocation1 [shape = 'u32[144,128]{1,0:T(1,128)}', space=vmem, size = 0x12000, scoped, tag = 'internal scratch']
  %s0 = inlined_call_operand.vmem [shape: bf16[8,128], index: 0, kind: input, shape index: {}]
  %s1 = inlined_call_operand.hbm [shape: bf16[128,128], index: 1, kind: input, shape index: {}]
  %s2 = inlined_call_operand.vmem [shape: f32[1,128], index: 2, kind: input, shape index: {}]
  %s3 = inlined_call_operand.hbm [shape: bf16[128,128], index: 3, kind: input, shape index: {}]
  %s4 = inlined_call_operand.vmem [shape: f32[1,128], index: 4, kind: input, shape index: {}]
  %s5 = inlined_call_operand.hbm [shape: bf16[128,128], index: 5, kind: input, shape index: {}]
  %s6 = inlined_call_operand.vmem [shape: f32[1,128], index: 6, kind: input, shape index: {}]
  %s7 = inlined_call_operand.hbm [shape: bf16[128,128], index: 7, kind: input, shape index: {}]
  %s8 = inlined_call_operand.vmem [shape: f32[1,128], index: 8, kind: input, shape index: {}]
  %s9 = inlined_call_operand.hbm [shape: f32[8,128], index: 9, kind: output, shape index: {}]
  %s10 = sld [smem:[#allocation0]]
  $region62: #{sparse_dae_forward.1} parent=0
    _
  %s12 = ssub.s32 1, %s10
  %s13 = scalar_select 0, %s12, %s10
  $region1: #{sparse_dae_forward.1} parent=0
    #allocation2 [shape = 'u8[32768]{0}', space=vmem, size = 0x8000, scoped, tag = 'input window, operand 1, single buffered']
    #allocation3 [shape = 's32[1]{0}', space=sflag, size = 0x4, scoped, tag = 'scoped memory for sparse_dae_forward.1']
    #allocation4 [shape = 's32[1]{0}', space=sflag, size = 0x4, scoped, tag = 'scoped memory for sparse_dae_forward.1']
    #allocation5 [shape = 'u8[32768]{0}', space=vmem, size = 0x8000, scoped, tag = 'input window, operand 3, single buffered']
    #allocation6 [shape = 's32[1]{0}', space=sflag, size = 0x4, scoped, tag = 'scoped memory for sparse_dae_forward.1']
    #allocation7 [shape = 'u8[32768]{0}', space=vmem, size = 0x8000, scoped, tag = 'input window, operand 5, single buffered']
    #allocation8 [shape = 'u8[32768]{0}', space=vmem, size = 0x8000, scoped, tag = 'input window, operand 7, single buffered']
    #allocation9 [shape = 's32[1]{0}', space=sflag, size = 0x4, scoped, tag = 'scoped memory for sparse_dae_forward.1']
    #allocation10 [shape = 'u8[4096]{0}', space=vmem, size = 0x1000, scoped, tag = 'output window, operand 0, single buffered']
    %14 = vsyncpa [#allocation3], 0
    %15 = vsyncpa [#allocation6], 0
    %16 = vsyncpa [#allocation9], 0
    %17 = vsyncpa [#allocation4], 0
    // Predicated region
    $region2: #{sparse_dae_forward.1} parent=1 // pred_check
      _
    $region3: #{sparse_dae_forward.1} parent=1 // pred_check_branch
      %19 = sbr.rel (0) target = $region5
    $region4: #{sparse_dae_forward.1} parent=1 // pred_region
      _
    $region5: #{sparse_dae_forward.1} parent=1 // pred_fallthru
      _
    // Predicated region
    $region6: #{sparse_dae_forward.1} parent=1 // pred_check
      _
    $region7: #{sparse_dae_forward.1} parent=1 // pred_check_branch
      %21 = sbr.rel (0) target = $region9
    $region8: #{sparse_dae_forward.1} parent=1 // pred_region
      %s23 = ssub.s32 1024, 1024
      %24 = vsyncadd [#allocation3], %s23
      %s25 = sshll.u32 [#allocation2], 4
      %s26 = int_to_ptr.vmem [resolvable:$true] %s25
      %31 = dma.hbm_to_vmem [thread:$0]  %s1, 1024, %s26, [#allocation3], 64, 64, 4
    $region9: #{sparse_dae_forward.1} parent=1 // pred_fallthru
      _
    // Predicated region
    $region10: #{sparse_dae_forward.1} parent=1 // pred_check
      _
    $region11: #{sparse_dae_forward.1} parent=1 // pred_check_branch
      %33 = sbr.rel (0) target = $region13
    $region12: #{sparse_dae_forward.1} parent=1 // pred_region
      _
    $region13: #{sparse_dae_forward.1} parent=1 // pred_fallthru
      _
    // Predicated region
    $region14: #{sparse_dae_forward.1} parent=1 // pred_check
      _
    $region15: #{sparse_dae_forward.1} parent=1 // pred_check_branch
      %35 = sbr.rel (0) target = $region17
    $region16: #{sparse_dae_forward.1} parent=1 // pred_region
      %s37 = ssub.s32 1024, 1024
      %38 = vsyncadd [#allocation6], %s37
      %s39 = sshll.u32 [#allocation5], 4
      %s40 = int_to_ptr.vmem [resolvable:$true] %s39
      %45 = dma.hbm_to_vmem [thread:$0]  %s3, 1024, %s40, [#allocation6], 64, 64, 4
    $region17: #{sparse_dae_forward.1} parent=1 // pred_fallthru
      _
    // Predicated region
    $region18: #{sparse_dae_forward.1} parent=1 // pred_check
      _
    $region19: #{sparse_dae_forward.1} parent=1 // pred_check_branch
      %47 = sbr.rel (0) target = $region21
    $region20: #{sparse_dae_forward.1} parent=1 // pred_region
      _
    $region21: #{sparse_dae_forward.1} parent=1 // pred_fallthru
      _
    // Predicated region
    $region22: #{sparse_dae_forward.1} parent=1 // pred_check
      _
    $region23: #{sparse_dae_forward.1} parent=1 // pred_check_branch
      %49 = sbr.rel (0) target = $region25
    $region24: #{sparse_dae_forward.1} parent=1 // pred_region
      %s51 = ssub.s32 1024, 1024
      %52 = vsyncadd [#allocation6], %s51
      %s53 = sshll.u32 [#allocation7], 4
      %s54 = int_to_ptr.vmem [resolvable:$true] %s53
      %59 = dma.hbm_to_vmem [thread:$0]  %s5, 1024, %s54, [#allocation6], 64, 64, 4
    $region25: #{sparse_dae_forward.1} parent=1 // pred_fallthru
      _
    // Predicated region
    $region26: #{sparse_dae_forward.1} parent=1 // pred_check
      _
    $region27: #{sparse_dae_forward.1} parent=1 // pred_check_branch
      %61 = sbr.rel (0) target = $region29
    $region28: #{sparse_dae_forward.1} parent=1 // pred_region
      _
    $region29: #{sparse_dae_forward.1} parent=1 // pred_fallthru
      _
    // Predicated region
    $region30: #{sparse_dae_forward.1} parent=1 // pred_check
      _
    $region31: #{sparse_dae_forward.1} parent=1 // pred_check_branch
      %63 = sbr.rel (0) target = $region33
    $region32: #{sparse_dae_forward.1} parent=1 // pred_region
      %s65 = ssub.s32 1024, 1024
      %66 = vsyncadd [#allocation9], %s65
      %s67 = sshll.u32 [#allocation8], 4
      %s68 = int_to_ptr.vmem [resolvable:$true] %s67
      %73 = dma.hbm_to_vmem [thread:$0]  %s7, 1024, %s68, [#allocation9], 64, 64, 4
    $region33: #{sparse_dae_forward.1} parent=1 // pred_fallthru
      _
    // Predicated region
    $region34: #{sparse_dae_forward.1} parent=1 // pred_check
      _
    $region35: #{sparse_dae_forward.1} parent=1 // pred_check_branch
      %75 = sbr.rel (0) target = $region37
    $region36: #{sparse_dae_forward.1} parent=1 // pred_region
      _
    $region37: #{sparse_dae_forward.1} parent=1 // pred_fallthru
      _
    // Predicated region
    $region38: #{sparse_dae_forward.1} parent=1 // pred_check
      _
    $region39: #{sparse_dae_forward.1} parent=1 // pred_check_branch
      %77 = sbr.rel (0) target = $region41
    $region40: #{sparse_dae_forward.1} parent=1 // pred_region
      %78 = dma.done [#allocation3], 1024
    $region41: #{sparse_dae_forward.1} parent=1 // pred_fallthru
      _
    // Predicated region
    $region42: #{sparse_dae_forward.1} parent=1 // pred_check
      _
    $region43: #{sparse_dae_forward.1} parent=1 // pred_check_branch
      %80 = sbr.rel (0) target = $region45
    $region44: #{sparse_dae_forward.1} parent=1 // pred_region
      %81 = dma.done [#allocation6], 1024
    $region45: #{sparse_dae_forward.1} parent=1 // pred_fallthru
      _
    // Predicated region
    $region46: #{sparse_dae_forward.1} parent=1 // pred_check
      _
    $region47: #{sparse_dae_forward.1} parent=1 // pred_check_branch
      %83 = sbr.rel (0) target = $region49
    $region48: #{sparse_dae_forward.1} parent=1 // pred_region
      %84 = dma.done [#allocation6], 1024
    $region49: #{sparse_dae_forward.1} parent=1 // pred_fallthru
      _
    // Predicated region
    $region50: #{sparse_dae_forward.1} parent=1 // pred_check
      _
    $region51: #{sparse_dae_forward.1} parent=1 // pred_check_branch
      %86 = sbr.rel (0) target = $region53
    $region52: #{sparse_dae_forward.1} parent=1 // pred_region
      %87 = dma.done [#allocation9], 1024
    $region53: #{sparse_dae_forward.1} parent=1 // pred_fallthru
      _
    %v89 = vld [vmem:[%s0] sm:$0xf]
    %v90 = vld [vmem:[#allocation2] sm:$0xf]
    %v91 = vld [vmem:[#allocation2 + $0x4] sm:$0xf]
    %v92 = vld [vmem:[#allocation2 + $0x8] sm:$0xf]
    %v93 = vld [vmem:[#allocation2 + $0xc] sm:$0xf]
    %v94 = vld [vmem:[#allocation2 + $0x10] sm:$0xf]
    %v95 = vld [vmem:[#allocation2 + $0x14] sm:$0xf]
    %v96 = vld [vmem:[#allocation2 + $0x18] sm:$0xf]
    %v97 = vld [vmem:[#allocation2 + $0x1c] sm:$0xf]
    %v98 = vld [vmem:[#allocation2 + $0x20] sm:$0xf]
    %v99 = vld [vmem:[#allocation2 + $0x24] sm:$0xf]
    %v100 = vld [vmem:[#allocation2 + $0x28] sm:$0xf]
    %v101 = vld [vmem:[#allocation2 + $0x2c] sm:$0xf]
    %v102 = vld [vmem:[#allocation2 + $0x30] sm:$0xf]
    %v103 = vld [vmem:[#allocation2 + $0x34] sm:$0xf]
    %v104 = vld [vmem:[#allocation2 + $0x38] sm:$0xf]
    %v105 = vld [vmem:[#allocation2 + $0x3c] sm:$0xf]
    %v106 = vld [vmem:[%s2] sm:$0x1]
    %v108 = vlaneseq
    %v109 = vshrl.u32 %v108, 7
    %v110 = vsub.s32 0, %v109
    %v111 = vrot.slane %v106, %v110
    %v129 = vunpack.c.l.b16 %v90
    %v130 = vunpack.c.l.b16 %v91
    %v131 = vunpack.c.l.b16 %v92
    %v132 = vunpack.c.l.b16 %v93
    %v133 = vunpack.c.l.b16 %v94
    %v134 = vunpack.c.l.b16 %v95
    %v135 = vunpack.c.l.b16 %v96
    %v136 = vunpack.c.l.b16 %v97
    %v137 = vunpack.c.l.b16 %v98
    %v138 = vunpack.c.l.b16 %v99
    %v139 = vunpack.c.l.b16 %v100
    %v140 = vunpack.c.l.b16 %v101
    %v141 = vunpack.c.l.b16 %v102
    %v142 = vunpack.c.l.b16 %v103
    %v143 = vunpack.c.l.b16 %v104
    %v144 = vunpack.c.l.b16 %v105
    %v145 = vpack.c.b16 %v130, %v129
    %v146 = vpack.c.b16 %v132, %v131
    %v147 = vpack.c.b16 %v134, %v133
    %v148 = vpack.c.b16 %v136, %v135
    %v149 = vpack.c.b16 %v138, %v137
    %v150 = vpack.c.b16 %v140, %v139
    %v151 = vpack.c.b16 %v142, %v141
    %v152 = vpack.c.b16 %v144, %v143
    %161 = vmatprep.subr.bf16.mxu0 0
    %162 = vmatpush1.bf16.msra.mxu0 %v152
    %163 = vmatprep.subr.bf16.mxu0 0
    %164 = vmatpush1.bf16.msra.mxu0 %v151
    %165 = vmatprep.subr.bf16.mxu0 0
    %166 = vmatpush1.bf16.msra.mxu0 %v150
    %167 = vmatprep.subr.bf16.mxu0 0
    %168 = vmatpush1.bf16.msra.mxu0 %v149
    %169 = vmatprep.subr.bf16.mxu0 0
    %170 = vmatpush1.bf16.msra.mxu0 %v148
    %171 = vmatprep.subr.bf16.mxu0 0
    %172 = vmatpush1.bf16.msra.mxu0 %v147
    %173 = vmatprep.subr.bf16.mxu0 0
    %174 = vmatpush1.bf16.msra.mxu0 %v146
    %175 = vmatprep.subr.bf16.mxu0 0
    %176 = vmatpush1.bf16.msra.mxu0 %v145
    %177 = vmatprep.subr.bf16.mxu0 0
    %178 = vmatpush2.bf16.msra.mxu0 0
    %179 = vmatprep.subr.bf16.mxu0 0
    %180 = vmatpush2.bf16.msra.mxu0 0
    %181 = vmatprep.subr.bf16.mxu0 0
    %182 = vmatpush2.bf16.msra.mxu0 0
    %183 = vmatprep.subr.bf16.mxu0 0
    %184 = vmatpush2.bf16.msra.mxu0 0
    %185 = vmatprep.subr.bf16.mxu0 0
    %186 = vmatpush2.bf16.msra.mxu0 0
    %187 = vmatprep.subr.bf16.mxu0 0
    %188 = vmatpush2.bf16.msra.mxu0 0
    %189 = vmatprep.subr.bf16.mxu0 0
    %190 = vmatpush2.bf16.msra.mxu0 0
    %191 = vmatprep.subr.bf16.mxu0 0
    %192 = vmatpush2.bf16.msra.mxu0 0
    %193 = vmatprep.mubr.bf16.mxu0 0
    %194 = vmatmul.mubr.bf16.gmra.mxu0 %v89
    %v195 = vpop.f32.mrf.mxu0
    %v196 = vadd.f32 %v111, %v195
    %v197 = vpop.f32.mrf.mxu0
    %v198 = vpop.f32.mrf.mxu0
    %v199 = vpop.f32.mrf.mxu0
    %200 = vdwg.mxu0
    %v201 = vmax.f32 %v196, 0.0
    %v202 = vpack.c.bf16 %v201, %v201
    %v203 = vld [vmem:[#allocation5] sm:$0xf]
    %v204 = vld [vmem:[#allocation5 + $0x4] sm:$0xf]
    %v205 = vld [vmem:[#allocation5 + $0x8] sm:$0xf]
    %v206 = vld [vmem:[#allocation5 + $0xc] sm:$0xf]
    %v207 = vld [vmem:[#allocation5 + $0x10] sm:$0xf]
    %v208 = vld [vmem:[#allocation5 + $0x14] sm:$0xf]
    %v209 = vld [vmem:[#allocation5 + $0x18] sm:$0xf]
    %v210 = vld [vmem:[#allocation5 + $0x1c] sm:$0xf]
    %v211 = vld [vmem:[#allocation5 + $0x20] sm:$0xf]
    %v212 = vld [vmem:[#allocation5 + $0x24] sm:$0xf]
    %v213 = vld [vmem:[#allocation5 + $0x28] sm:$0xf]
    %v214 = vld [vmem:[#allocation5 + $0x2c] sm:$0xf]
    %v215 = vld [vmem:[#allocation5 + $0x30] sm:$0xf]
    %v216 = vld [vmem:[#allocation5 + $0x34] sm:$0xf]
    %v217 = vld [vmem:[#allocation5 + $0x38] sm:$0xf]
    %v218 = vld [vmem:[#allocation5 + $0x3c] sm:$0xf]
    %v219 = vld [vmem:[%s4] sm:$0x1]
    %v221 = vlaneseq
    %v222 = vshrl.u32 %v221, 7
    %v223 = vsub.s32 0, %v222
    %v224 = vrot.slane %v219, %v223
    %v242 = vunpack.c.l.b16 %v203
    %v243 = vunpack.c.l.b16 %v204
    %v244 = vunpack.c.l.b16 %v205
    %v245 = vunpack.c.l.b16 %v206
    %v246 = vunpack.c.l.b16 %v207
    %v247 = vunpack.c.l.b16 %v208
    %v248 = vunpack.c.l.b16 %v209
    %v249 = vunpack.c.l.b16 %v210
    %v250 = vunpack.c.l.b16 %v211
    %v251 = vunpack.c.l.b16 %v212
    %v252 = vunpack.c.l.b16 %v213
    %v253 = vunpack.c.l.b16 %v214
    %v254 = vunpack.c.l.b16 %v215
    %v255 = vunpack.c.l.b16 %v216
    %v256 = vunpack.c.l.b16 %v217
    %v257 = vunpack.c.l.b16 %v218
    %v258 = vpack.c.b16 %v243, %v242
    %v259 = vpack.c.b16 %v245, %v244
    %v260 = vpack.c.b16 %v247, %v246
    %v261 = vpack.c.b16 %v249, %v248
    %v262 = vpack.c.b16 %v251, %v250
    %v263 = vpack.c.b16 %v253, %v252
    %v264 = vpack.c.b16 %v255, %v254
    %v265 = vpack.c.b16 %v257, %v256
    %274 = vmatprep.subr.bf16.mxu0 0
    %275 = vmatpush1.bf16.msra.mxu0 %v265
    %276 = vmatprep.subr.bf16.mxu0 0
    %277 = vmatpush1.bf16.msra.mxu0 %v264
    %278 = vmatprep.subr.bf16.mxu0 0
    %279 = vmatpush1.bf16.msra.mxu0 %v263
    %280 = vmatprep.subr.bf16.mxu0 0
    %281 = vmatpush1.bf16.msra.mxu0 %v262
    %282 = vmatprep.subr.bf16.mxu0 0
    %283 = vmatpush1.bf16.msra.mxu0 %v261
    %284 = vmatprep.subr.bf16.mxu0 0
    %285 = vmatpush1.bf16.msra.mxu0 %v260
    %286 = vmatprep.subr.bf16.mxu0 0
    %287 = vmatpush1.bf16.msra.mxu0 %v259
    %288 = vmatprep.subr.bf16.mxu0 0
    %289 = vmatpush1.bf16.msra.mxu0 %v258
    %290 = vmatprep.subr.bf16.mxu0 0
    %291 = vmatpush2.bf16.msra.mxu0 0
    %292 = vmatprep.subr.bf16.mxu0 0
    %293 = vmatpush2.bf16.msra.mxu0 0
    %294 = vmatprep.subr.bf16.mxu0 0
    %295 = vmatpush2.bf16.msra.mxu0 0
    %296 = vmatprep.subr.bf16.mxu0 0
    %297 = vmatpush2.bf16.msra.mxu0 0
    %298 = vmatprep.subr.bf16.mxu0 0
    %299 = vmatpush2.bf16.msra.mxu0 0
    %300 = vmatprep.subr.bf16.mxu0 0
    %301 = vmatpush2.bf16.msra.mxu0 0
    %302 = vmatprep.subr.bf16.mxu0 0
    %303 = vmatpush2.bf16.msra.mxu0 0
    %304 = vmatprep.subr.bf16.mxu0 0
    %305 = vmatpush2.bf16.msra.mxu0 0
    %306 = vmatprep.mubr.bf16.mxu0 0
    %307 = vmatmul.mubr.bf16.gmra.mxu0 %v202
    %v308 = vpop.f32.mrf.mxu0
    %v309 = vadd.f32 %v224, %v308
    %v310 = vpop.f32.mrf.mxu0
    %v311 = vpop.f32.mrf.mxu0
    %v312 = vpop.f32.mrf.mxu0
    %313 = vdwg.mxu0
    %v314 = vmax.f32 %v309, 0.0
    %v315 = vpack.c.bf16 %v314, %v314
    %v316 = vld [vmem:[#allocation7] sm:$0xf]
    %v317 = vld [vmem:[#allocation7 + $0x4] sm:$0xf]
    %v318 = vld [vmem:[#allocation7 + $0x8] sm:$0xf]
    %v319 = vld [vmem:[#allocation7 + $0xc] sm:$0xf]
    %v320 = vld [vmem:[#allocation7 + $0x10] sm:$0xf]
    %v321 = vld [vmem:[#allocation7 + $0x14] sm:$0xf]
    %v322 = vld [vmem:[#allocation7 + $0x18] sm:$0xf]
    %v323 = vld [vmem:[#allocation7 + $0x1c] sm:$0xf]
    %v324 = vld [vmem:[#allocation7 + $0x20] sm:$0xf]
    %v325 = vld [vmem:[#allocation7 + $0x24] sm:$0xf]
    %v326 = vld [vmem:[#allocation7 + $0x28] sm:$0xf]
    %v327 = vld [vmem:[#allocation7 + $0x2c] sm:$0xf]
    %v328 = vld [vmem:[#allocation7 + $0x30] sm:$0xf]
    %v329 = vld [vmem:[#allocation7 + $0x34] sm:$0xf]
    %v330 = vld [vmem:[#allocation7 + $0x38] sm:$0xf]
    %v331 = vld [vmem:[#allocation7 + $0x3c] sm:$0xf]
    %v332 = vld [vmem:[%s6] sm:$0x1]
    %v334 = vlaneseq
    %v335 = vshrl.u32 %v334, 7
    %v336 = vsub.s32 0, %v335
    %v337 = vrot.slane %v332, %v336
    %v355 = vunpack.c.l.b16 %v316
    %v356 = vunpack.c.l.b16 %v317
    %v357 = vunpack.c.l.b16 %v318
    %v358 = vunpack.c.l.b16 %v319
    %v359 = vunpack.c.l.b16 %v320
    %v360 = vunpack.c.l.b16 %v321
    %v361 = vunpack.c.l.b16 %v322
    %v362 = vunpack.c.l.b16 %v323
    %v363 = vunpack.c.l.b16 %v324
    %v364 = vunpack.c.l.b16 %v325
    %v365 = vunpack.c.l.b16 %v326
    %v366 = vunpack.c.l.b16 %v327
    %v367 = vunpack.c.l.b16 %v328
    %v368 = vunpack.c.l.b16 %v329
    %v369 = vunpack.c.l.b16 %v330
    %v370 = vunpack.c.l.b16 %v331
    %v371 = vpack.c.b16 %v356, %v355
    %v372 = vpack.c.b16 %v358, %v357
    %v373 = vpack.c.b16 %v360, %v359
    %v374 = vpack.c.b16 %v362, %v361
    %v375 = vpack.c.b16 %v364, %v363
    %v376 = vpack.c.b16 %v366, %v365
    %v377 = vpack.c.b16 %v368, %v367
    %v378 = vpack.c.b16 %v370, %v369
    %387 = vmatprep.subr.bf16.mxu0 0
    %388 = vmatpush1.bf16.msra.mxu0 %v378
    %389 = vmatprep.subr.bf16.mxu0 0
    %390 = vmatpush1.bf16.msra.mxu0 %v377
    %391 = vmatprep.subr.bf16.mxu0 0
    %392 = vmatpush1.bf16.msra.mxu0 %v376
    %393 = vmatprep.subr.bf16.mxu0 0
    %394 = vmatpush1.bf16.msra.mxu0 %v375
    %395 = vmatprep.subr.bf16.mxu0 0
    %396 = vmatpush1.bf16.msra.mxu0 %v374
    %397 = vmatprep.subr.bf16.mxu0 0
    %398 = vmatpush1.bf16.msra.mxu0 %v373
    %399 = vmatprep.subr.bf16.mxu0 0
    %400 = vmatpush1.bf16.msra.mxu0 %v372
    %401 = vmatprep.subr.bf16.mxu0 0
    %402 = vmatpush1.bf16.msra.mxu0 %v371
    %403 = vmatprep.subr.bf16.mxu0 0
    %404 = vmatpush2.bf16.msra.mxu0 0
    %405 = vmatprep.subr.bf16.mxu0 0
    %406 = vmatpush2.bf16.msra.mxu0 0
    %407 = vmatprep.subr.bf16.mxu0 0
    %408 = vmatpush2.bf16.msra.mxu0 0
    %409 = vmatprep.subr.bf16.mxu0 0
    %410 = vmatpush2.bf16.msra.mxu0 0
    %411 = vmatprep.subr.bf16.mxu0 0
    %412 = vmatpush2.bf16.msra.mxu0 0
    %413 = vmatprep.subr.bf16.mxu0 0
    %414 = vmatpush2.bf16.msra.mxu0 0
    %415 = vmatprep.subr.bf16.mxu0 0
    %416 = vmatpush2.bf16.msra.mxu0 0
    %417 = vmatprep.subr.bf16.mxu0 0
    %418 = vmatpush2.bf16.msra.mxu0 0
    %419 = vmatprep.mubr.bf16.mxu0 0
    %420 = vmatmul.mubr.bf16.gmra.mxu0 %v315
    %v421 = vpop.f32.mrf.mxu0
    %v422 = vadd.f32 %v337, %v421
    %v423 = vpop.f32.mrf.mxu0
    %v424 = vpop.f32.mrf.mxu0
    %v425 = vpop.f32.mrf.mxu0
    %426 = vdwg.mxu0
    %v427 = vmax.f32 %v422, 0.0
    %v428 = vpack.c.bf16 %v427, %v427
    %v429 = vld [vmem:[#allocation8] sm:$0xf]
    %v430 = vld [vmem:[#allocation8 + $0x4] sm:$0xf]
    %v431 = vld [vmem:[#allocation8 + $0x8] sm:$0xf]
    %v432 = vld [vmem:[#allocation8 + $0xc] sm:$0xf]
    %v433 = vld [vmem:[#allocation8 + $0x10] sm:$0xf]
    %v434 = vld [vmem:[#allocation8 + $0x14] sm:$0xf]
    %v435 = vld [vmem:[#allocation8 + $0x18] sm:$0xf]
    %v436 = vld [vmem:[#allocation8 + $0x1c] sm:$0xf]
    %v437 = vld [vmem:[#allocation8 + $0x20] sm:$0xf]
    %v438 = vld [vmem:[#allocation8 + $0x24] sm:$0xf]
    %v439 = vld [vmem:[#allocation8 + $0x28] sm:$0xf]
    %v440 = vld [vmem:[#allocation8 + $0x2c] sm:$0xf]
    %v441 = vld [vmem:[#allocation8 + $0x30] sm:$0xf]
    %v442 = vld [vmem:[#allocation8 + $0x34] sm:$0xf]
    %v443 = vld [vmem:[#allocation8 + $0x38] sm:$0xf]
    %v444 = vld [vmem:[#allocation8 + $0x3c] sm:$0xf]
    %v445 = vld [vmem:[%s8] sm:$0x1]
    %v447 = vlaneseq
    %v448 = vshrl.u32 %v447, 7
    %v449 = vsub.s32 0, %v448
    %v450 = vrot.slane %v445, %v449
    %v468 = vunpack.c.l.b16 %v429
    %v469 = vunpack.c.l.b16 %v430
    %v470 = vunpack.c.l.b16 %v431
    %v471 = vunpack.c.l.b16 %v432
    %v472 = vunpack.c.l.b16 %v433
    %v473 = vunpack.c.l.b16 %v434
    %v474 = vunpack.c.l.b16 %v435
    %v475 = vunpack.c.l.b16 %v436
    %v476 = vunpack.c.l.b16 %v437
    %v477 = vunpack.c.l.b16 %v438
    %v478 = vunpack.c.l.b16 %v439
    %v479 = vunpack.c.l.b16 %v440
    %v480 = vunpack.c.l.b16 %v441
    %v481 = vunpack.c.l.b16 %v442
    %v482 = vunpack.c.l.b16 %v443
    %v483 = vunpack.c.l.b16 %v444
    %v484 = vpack.c.b16 %v469, %v468
    %v485 = vpack.c.b16 %v471, %v470
    %v486 = vpack.c.b16 %v473, %v472
    %v487 = vpack.c.b16 %v475, %v474
    %v488 = vpack.c.b16 %v477, %v476
    %v489 = vpack.c.b16 %v479, %v478
    %v490 = vpack.c.b16 %v481, %v480
    %v491 = vpack.c.b16 %v483, %v482
    %500 = vmatprep.subr.bf16.mxu0 0
    %501 = vmatpush1.bf16.msra.mxu0 %v491
    %502 = vmatprep.subr.bf16.mxu0 0
    %503 = vmatpush1.bf16.msra.mxu0 %v490
    %504 = vmatprep.subr.bf16.mxu0 0
    %505 = vmatpush1.bf16.msra.mxu0 %v489
    %506 = vmatprep.subr.bf16.mxu0 0
    %507 = vmatpush1.bf16.msra.mxu0 %v488
    %508 = vmatprep.subr.bf16.mxu0 0
    %509 = vmatpush1.bf16.msra.mxu0 %v487
    %510 = vmatprep.subr.bf16.mxu0 0
    %511 = vmatpush1.bf16.msra.mxu0 %v486
    %512 = vmatprep.subr.bf16.mxu0 0
    %513 = vmatpush1.bf16.msra.mxu0 %v485
    %514 = vmatprep.subr.bf16.mxu0 0
    %515 = vmatpush1.bf16.msra.mxu0 %v484
    %516 = vmatprep.subr.bf16.mxu0 0
    %517 = vmatpush2.bf16.msra.mxu0 0
    %518 = vmatprep.subr.bf16.mxu0 0
    %519 = vmatpush2.bf16.msra.mxu0 0
    %520 = vmatprep.subr.bf16.mxu0 0
    %521 = vmatpush2.bf16.msra.mxu0 0
    %522 = vmatprep.subr.bf16.mxu0 0
    %523 = vmatpush2.bf16.msra.mxu0 0
    %524 = vmatprep.subr.bf16.mxu0 0
    %525 = vmatpush2.bf16.msra.mxu0 0
    %526 = vmatprep.subr.bf16.mxu0 0
    %527 = vmatpush2.bf16.msra.mxu0 0
    %528 = vmatprep.subr.bf16.mxu0 0
    %529 = vmatpush2.bf16.msra.mxu0 0
    %530 = vmatprep.subr.bf16.mxu0 0
    %531 = vmatpush2.bf16.msra.mxu0 0
    %532 = vmatprep.mubr.bf16.mxu0 0
    %533 = vmatmul.mubr.bf16.gmra.mxu0 %v428
    %v534 = vpop.f32.mrf.mxu0
    %v535 = vadd.f32 %v450, %v534
    %v536 = vpop.f32.mrf.mxu0
    %v537 = vpop.f32.mrf.mxu0
    %v538 = vpop.f32.mrf.mxu0
    %539 = vdwg.mxu0
    %540 = vst [vmem:[#allocation10] sm:$0xff] %v535
    // Predicated region
    $region54: #{sparse_dae_forward.1} parent=1 // pred_check
      _
    $region55: #{sparse_dae_forward.1} parent=1 // pred_check_branch
      %542 = sbr.rel (0) target = $region57
    $region56: #{sparse_dae_forward.1} parent=1 // pred_region
      %s544 = ssub.s32 128, 128
      %545 = vsyncadd [#allocation4], %s544
      %s547 = sshll.u32 [#allocation10], 4
      %s548 = int_to_ptr.vmem [resolvable:$true] %s547
      %550 = dma.vmem_to_hbm [thread:$0]  %s548, 128, %s9, [#allocation4]
    $region57: #{sparse_dae_forward.1} parent=1 // pred_fallthru
      _
    // Predicated region
    $region58: #{sparse_dae_forward.1} parent=1 // pred_check
      _
    $region59: #{sparse_dae_forward.1} parent=1 // pred_check_branch
      %552 = sbr.rel (0) target = $region61
    $region60: #{sparse_dae_forward.1} parent=1 // pred_region
      %553 = dma.done [#allocation4], 128
    $region61: #{sparse_dae_forward.1} parent=1 // pred_fallthru
      _
    %554 = vsyncpa [#allocation3], 1
    %555 = vsyncpa [#allocation6], 1
    %556 = vsyncpa [#allocation9], 1
    %557 = vsyncpa [#allocation4], 1

</llo_original>
